<compile_context>
chip_gen: v6e
topology: v6e:2x2x1
jax: 0.10.0
libtpu: 0.0.40
codegen_flags: <defaults>
</compile_context>

<pallas_src>
import numpy as np
import jax
import jax.numpy as jnp
from jax import lax
from jax.experimental import pallas as pl
from jax.experimental.pallas import tpu as pltpu


_VMEM_BUDGET = 40 * 1024 * 1024      # per-step estimate target (fits v7x's 64 MiB VMEM)


def _fold_rope_and_scale(Wqkv, bqkv, Wfc, bfc, num_heads, compute_dtype):
    """Fold the (head-index-based) RoPE rotation and the 1/sqrt(D) score scale into the
    QKV projection parameters.  Returns transposed weights laid out for y = x @ W + b."""
    threeC, C = Wqkv.shape
    H = num_heads
    D = C // H
    D2 = D // 2

    # Same tables the PyTorch RotaryPositionalEncoding builds (d_model == depth == D),
    # with "position" == head index (exactly how the module indexes a (B,H,T,D) tensor).
    inv_freq = 1.0 / 10000.0 ** (np.arange(0, D, 2, dtype=np.float32) / D)      # (D2,)
    theta = np.arange(H, dtype=np.float32)[:, None] * inv_freq[None, :]          # (H, D2)
    cos, sin = np.cos(theta), np.sin(theta)

    # Rotation acting on the q (and k) output-channel axis.
    R = np.zeros((C, C), dtype=np.float32)
    for h in range(H):
        for j in range(D2):
            c1 = h * D + 2 * j
            c2 = c1 + 1
            R[c1, c1] = cos[h, j]
            R[c1, c2] = -sin[h, j]
            R[c2, c1] = sin[h, j]
            R[c2, c2] = cos[h, j]
    R = jnp.asarray(R)

    scale = 1.0 / float(D) ** 0.5
    Wq, Wk, Wv = Wqkv[:C], Wqkv[C:2 * C], Wqkv[2 * C:]
    bq, bk, bv = bqkv[:C], bqkv[C:2 * C], bqkv[2 * C:]

    Wq_f = (R @ Wq) * scale          # fold rotation + score scale into q
    bq_f = (R @ bq) * scale
    Wk_f = R @ Wk                    # fold rotation into k
    bk_f = R @ bk

    W_all = jnp.concatenate([Wq_f, Wk_f, Wv], axis=0)        # (3C, C)
    b_all = jnp.concatenate([bq_f, bk_f, bv], axis=0)        # (3C,)

    WqkvT = W_all.T.astype(compute_dtype)                    # (C, 3C)
    bqkv2 = b_all.reshape(1, 3 * C).astype(jnp.float32)      # bias added post-accum (f32)
    WfcT = jnp.asarray(Wfc).T.astype(compute_dtype)          # (C, C)
    bfc2 = jnp.asarray(bfc).reshape(1, C).astype(jnp.float32)
    return WqkvT, bqkv2, WfcT, bfc2


def _vmem_estimate(Mb, C, cdt, sdt, out_dtype):
    ci = jnp.dtype(cdt).itemsize
    si = jnp.dtype(sdt).itemsize
    oi = jnp.dtype(out_dtype).itemsize
    return (2 * Mb * C * ci                       # x block (double buffered)
            + 2 * Mb * C * oi                     # out block (double buffered)
            + 2 * (3 * C * C + C * C) * ci        # WqkvT + WfcT (double buffered)
            + 2 * (3 * C + C) * 4                 # biases
            + Mb * 3 * C * si + Mb * C * si)      # qkv + oslab scratch slabs


def _choose_bB(B, T, rows_per_step, C, cdt, sdt, out_dtype):
    """Batch elements per grid step: fill the MXU M dim, keep the (8, .) sublane rule,
    prefer a grid of >= 2 steps (2-TC chips), and respect the VMEM budget."""
    divisors = [d for d in range(1, B + 1) if B % d == 0]
    good = [d for d in divisors if (d * T) % 8 == 0 or d == B]
    if not good:
        good = [B]
    target = max(1, -(-rows_per_step // T))       # ceil(rows_per_step / T)
    bB = None
    for need_grid2 in (True, False):
        cands = [d for d in good if d >= target and (not need_grid2 or B // d >= 2)]
        if cands:
            bB = min(cands)
            break
    if bB is None:
        bB = max(good)
    # Shrink the tile if the per-step VMEM estimate blows the budget.
    while _vmem_estimate(bB * T, C, cdt, sdt, out_dtype) > _VMEM_BUDGET:
        smaller = [d for d in good if d < bB]
        if not smaller:
            break
        bB = max(smaller)
    return bB


def mhsa_pallas(x, Wqkv, bqkv, Wfc, bfc, num_heads, *, use_bf16=True, rows_per_step=256):
    """Forward pass of the PyTorch MultiHeadSelfAttention module.

    x:     (B, T, C) float32
    Wqkv:  (3C, C)   float32   (PyTorch nn.Linear weight layout)
    bqkv:  (3C,)     float32
    Wfc:   (C, C)    float32
    bfc:   (C,)      float32
    """
    B, T, C = x.shape
    H = num_heads
    D = C // H
    cdt = jnp.bfloat16 if use_bf16 else jnp.float32

    # Scratch-slab dtype: use the compute dtype when the per-batch row offsets (multiples
    # of T) stay aligned to the dtype's sublane packing (always true for realistic T);
    # otherwise fall back to f32 so dynamic row slices stay tile-aligned.
    pack = 16 if cdt == jnp.bfloat16 else 8
    sdt = cdt if (T % pack == 0) else jnp.float32

    WqkvT, bqkv2, WfcT, bfc2 = _fold_rope_and_scale(
        jnp.asarray(Wqkv), jnp.asarray(bqkv), Wfc, bfc, H, cdt)

    bB = _choose_bB(B, T, rows_per_step, C, cdt, sdt, x.dtype)
    Mb = bB * T
    grid = (B // bB,)

    # KV chunk size for the online-softmax loop (never materialize a (T, T) score tile).
    ckv = T
    for c in (512, 256, 128):
        if T % c == 0:
            ckv = c
            break
    n_kv = T // ckv

    # Heads per lane-dense output store (pack 128//D heads per store when D < 128).
    if D >= 128:
        hps = 1
    else:
        hps = min(H, 128 // D)
        while H % hps != 0:
            hps -= 1
    n_groups = H // hps

    x2d = x.reshape(B * T, C).astype(cdt)         # DMA x in the compute dtype
    dn = (((1,), (1,)), ((), ()))                 # (T,D) x (ckv,D) -> (T,ckv)

    def kernel(x_ref, wqkv_ref, bqkv_ref, wfc_ref, bfc_ref, o_ref, qkv_ref, oslab_ref):
        # Fused QKV projection over the whole (Mb, C) row slab, staged into VMEM scratch
        # (ref slices of the scratch are zero-cost; no live (Mb, 3C) value across loops).
        qkv = jnp.dot(x_ref[...], wqkv_ref[...], preferred_element_type=jnp.float32)
        qkv_ref[...] = (qkv + bqkv_ref[...]).astype(sdt)

        # Attention per batch row; fori_loop bounds live ranges per iteration.  Heads use
        # static lane offsets; KV is consumed in chunks with online-softmax accumulators.
        def batch_body(b, carry):
            r0 = pl.multiple_of(b * T, T)
            for g in range(n_groups):
                outs = []
                for h in range(g * hps, (g + 1) * hps):
                    c0 = h * D
                    q = qkv_ref[pl.ds(r0, T), pl.ds(c0, D)].astype(cdt)

                    def kv_body(j, mla):
                        m_i, l_i, acc = mla
                        ks = r0 + j * ckv
                        kc = qkv_ref[pl.ds(ks, ckv), pl.ds(C + c0, D)].astype(cdt)
                        vc = qkv_ref[pl.ds(ks, ckv), pl.ds(2 * C + c0, D)].astype(cdt)
                        s = lax.dot_general(q, kc, dn, preferred_element_type=jnp.float32)
                        m_new = jnp.maximum(m_i, jnp.max(s, axis=-1, keepdims=True))
                        alpha = jnp.exp(m_i - m_new)
                        p = jnp.exp(s - m_new)            # f32 softmax math (v5e-safe)
                        l_new = alpha * l_i + jnp.sum(p, axis=-1, keepdims=True)
                        acc_new = alpha * acc + jnp.dot(
                            p.astype(cdt), vc, preferred_element_type=jnp.float32)
                        return m_new, l_new, acc_new

                    init = (jnp.full((T, 1), -jnp.inf, jnp.float32),
                            jnp.zeros((T, 1), jnp.float32),
                            jnp.zeros((T, D), jnp.float32))
                    if n_kv == 1:
                        m_i, l_i, acc = kv_body(0, init)
                    else:
                        m_i, l_i, acc = lax.fori_loop(0, n_kv, kv_body, init)

                    if use_bf16:
                        o_h = acc * pl.reciprocal(l_i, approx=True)   # EUP slot
                    else:
                        o_h = acc / l_i                               # exact f32 path
                    outs.append(o_h)

                # Lane-dense store of a whole head group (hps * D lanes) per batch row.
                row = outs[0] if len(outs) == 1 else jnp.concatenate(outs, axis=-1)
                oslab_ref[pl.ds(r0, T), pl.ds(g * hps * D, hps * D)] = row.astype(sdt)
            return carry

        lax.fori_loop(0, bB, batch_body, 0)

        # Final projection over the contiguous (Mb, C) attention-output slab.
        y = jnp.dot(oslab_ref[...].astype(cdt), wfc_ref[...],
                    preferred_element_type=jnp.float32)
        o_ref[...] = (y + bfc_ref[...]).astype(o_ref.dtype)

    est = _vmem_estimate(Mb, C, cdt, sdt, x.dtype)
    vmem_limit = int(min(max(2 * est, 32 * 1024 * 1024), 56 * 1024 * 1024))

    out2d = pl.pallas_call(
        kernel,
        out_shape=jax.ShapeDtypeStruct((B * T, C), x.dtype),
        grid_spec=pltpu.PrefetchScalarGridSpec(
            num_scalar_prefetch=0,
            grid=grid,
            in_specs=[
                pl.BlockSpec((Mb, C), lambda i: (i, 0)),
                pl.BlockSpec((C, 3 * C), lambda i: (0, 0)),
                pl.BlockSpec((1, 3 * C), lambda i: (0, 0)),
                pl.BlockSpec((C, C), lambda i: (0, 0)),
                pl.BlockSpec((1, C), lambda i: (0, 0)),
            ],
            out_specs=pl.BlockSpec((Mb, C), lambda i: (i, 0)),
            scratch_shapes=[pltpu.VMEM((Mb, 3 * C), sdt),
                            pltpu.VMEM((Mb, C), sdt)],
        ),
        compiler_params=pltpu.CompilerParams(
            dimension_semantics=("parallel",),
            vmem_limit_bytes=vmem_limit,
        ),
    )(x2d, WqkvT, bqkv2, WfcT, bfc2)
    return out2d.reshape(B, T, C)


# --- pure-JAX f32 reference reproducing the PyTorch forward verbatim -----------------
def mhsa_reference(x, Wqkv, bqkv, Wfc, bfc, num_heads):
    B, T, C = x.shape
    H = num_heads
    D = C // H
    qkv = x @ Wqkv.T + bqkv                                         # (B, T, 3C)
    qkv = qkv.reshape(B, T, 3, H, D).transpose(2, 0, 3, 1, 4)        # (3, B, H, T, D)
    q, k, v = qkv[0], qkv[1], qkv[2]

    def rope(t):
        seq_len = t.shape[1]  # == H, exactly as the PyTorch code indexes it
        inv_freq = 1.0 / 10000 ** (jnp.arange(0, D, 2, dtype=jnp.float32) / D)
        freqs = jnp.outer(jnp.arange(seq_len, dtype=jnp.float32), inv_freq)
        sin = jnp.sin(freqs)[:, None, :]
        cos = jnp.cos(freqs)[:, None, :]
        x1, x2 = t[..., ::2], t[..., 1::2]
        t_rot = jnp.stack([x1 * cos - x2 * sin, x1 * sin + x2 * cos], axis=-1)
        return t_rot.reshape(t.shape)

    q, k = rope(q), rope(k)
    scores = q @ jnp.swapaxes(k, -2, -1) / float(D) ** 0.5
    attn = jax.nn.softmax(scores, axis=-1)
    out = attn @ v
    out = jnp.swapaxes(out, 1, 2).reshape(B, T, C)
    return out @ Wfc.T + bfc


if __name__ == "__main__":
    B, T, d_model, num_heads = 2, 8, 32, 4

    key = jax.random.PRNGKey(0)
    k1, k2, k3, k4, k5 = jax.random.split(key, 5)
    x = jax.random.normal(k1, (B, T, d_model), dtype=jnp.float32)
    Wqkv = jax.random.normal(k2, (3 * d_model, d_model), dtype=jnp.float32) * 0.1
    bqkv = jax.random.normal(k3, (3 * d_model,), dtype=jnp.float32) * 0.1
    Wfc = jax.random.normal(k4, (d_model, d_model), dtype=jnp.float32) * 0.1
    bfc = jax.random.normal(k5, (d_model,), dtype=jnp.float32) * 0.1

    y_ref = mhsa_reference(x, Wqkv, bqkv, Wfc, bfc, num_heads)

    # 1) f32 MXU path: checks exact semantics (fold + online softmax + FC), exact divide.
    y32 = mhsa_pallas(x, Wqkv, bqkv, Wfc, bfc, num_heads, use_bf16=False)
    jax.block_until_ready(y32)
    assert y32.shape == (B, T, d_model)
    err32 = float(jnp.max(jnp.abs(y32 - y_ref)))
    assert jnp.allclose(y32, y_ref, atol=5e-3, rtol=5e-3), f"f32 max abs err = {err32}"

    # 2) bf16-MXU path (performance default): bf16 operands / f32 accumulation, so allow
    #    a looser tolerance vs. the pure-f32 reference.
    y = mhsa_pallas(x, Wqkv, bqkv, Wfc, bfc, num_heads, use_bf16=True)
    jax.block_until_ready(y)
    assert y.shape == (B, T, d_model)
    err16 = float(jnp.max(jnp.abs(y - y_ref)))
    assert jnp.allclose(y, y_ref, atol=5e-2, rtol=5e-2), f"bf16 max abs err = {err16}"

    print("KERNEL_OK")
</pallas_src>

<mosaic_0001>
module attributes {stable_mosaic.version = 11 : i64} {
  func.func @kernel(%arg0: i32, %arg1: memref<16x32xf32, #tpu.memory_space<vmem>>, %arg2: memref<32x96xf32, #tpu.memory_space<vmem>>, %arg3: memref<1x96xf32, #tpu.memory_space<vmem>>, %arg4: memref<32x32xf32, #tpu.memory_space<vmem>>, %arg5: memref<1x32xf32, #tpu.memory_space<vmem>>, %arg6: memref<16x32xf32, #tpu.memory_space<vmem>>, %arg7: memref<16x96xf32, #tpu.memory_space<vmem>>, %arg8: memref<16x32xf32, #tpu.memory_space<vmem>>) attributes {dimension_semantics = [#tpu.dimension_semantics<parallel>], iteration_bounds = array<i64: 1>, scalar_prefetch = 0 : i64, scratch_operands = 2 : i64, tpu.core_type = #tpu.core_type<tc>, window_params = [{transform_indices = @transform_0, window_bounds = array<i64: 16, 32>}, {pipeline_mode = #tpu.pipeline_mode<synchronous>, transform_indices = @transform_1, window_bounds = array<i64: 32, 96>}, {pipeline_mode = #tpu.pipeline_mode<synchronous>, transform_indices = @transform_2, window_bounds = array<i64: 1, 96>}, {pipeline_mode = #tpu.pipeline_mode<synchronous>, transform_indices = @transform_3, window_bounds = array<i64: 32, 32>}, {pipeline_mode = #tpu.pipeline_mode<synchronous>, transform_indices = @transform_4, window_bounds = array<i64: 1, 32>}, {transform_indices = @transform_5, window_bounds = array<i64: 16, 32>}]} {
    %c0 = arith.constant 0 : index
    %c0_0 = arith.constant 0 : index
    %0 = vector.load %arg1[%c0, %c0_0] : memref<16x32xf32, #tpu.memory_space<vmem>>, vector<16x32xf32>
    %c0_1 = arith.constant 0 : index
    %c0_2 = arith.constant 0 : index
    %1 = vector.load %arg2[%c0_1, %c0_2] : memref<32x96xf32, #tpu.memory_space<vmem>>, vector<32x96xf32>
    %cst = arith.constant dense<0.000000e+00> : vector<16x96xf32>
    %2 = tpu.matmul %0, %1, %cst {dimension_numbers = #tpu.dot_dimension_numbers<[1], [0], [0], [1], [0, 0, 1, 1], [], []>} : vector<16x32xf32>, vector<32x96xf32>, vector<16x96xf32> -> vector<16x96xf32>
    %c0_3 = arith.constant 0 : index
    %c0_4 = arith.constant 0 : index
    %3 = vector.load %arg3[%c0_3, %c0_4] : memref<1x96xf32, #tpu.memory_space<vmem>>, vector<1x96xf32>
    %4 = vector.broadcast %3 : vector<1x96xf32> to vector<16x96xf32>
    %5 = arith.addf %2, %4 : vector<16x96xf32>
    %c0_5 = arith.constant 0 : index
    %c0_6 = arith.constant 0 : index
    %6 = vector.load %arg7[%c0_5, %c0_6] : memref<16x96xf32, #tpu.memory_space<vmem>>, vector<16x96xf32>
    tpu.vector_store %arg7[%c0_5, %c0_6], %5 {strides = array<i32>} : memref<16x96xf32, #tpu.memory_space<vmem>>, vector<16x96xf32>,
    %c0_i32 = arith.constant 0 : i32
    %c2_i32 = arith.constant 2 : i32
    %7 = arith.addi %c0_i32, %c2_i32 : i32
    %c1_i32 = arith.constant 1 : i32
    scf.for %arg9 = %c0_i32 to %7 step %c1_i32  : i32 {
      %c8_i32 = arith.constant 8 : i32
      %15 = arith.muli %arg9, %c8_i32 : i32
      %16 = tpu.assume_multiple %15, 8 : i32
      %17 = arith.index_cast %16 : i32 to index
      %c0_17 = arith.constant 0 : index
      %18 = vector.load %arg7[%17, %c0_17] : memref<16x96xf32, #tpu.memory_space<vmem>>, vector<8x8xf32>
      %cst_18 = arith.constant 0xFF800000 : f32
      %19 = vector.broadcast %cst_18 : f32 to vector<8x1xf32>
      %cst_19 = arith.constant 0.000000e+00 : f32
      %20 = vector.broadcast %cst_19 : f32 to vector<8x1xf32>
      %cst_20 = arith.constant 0.000000e+00 : f32
      %21 = vector.broadcast %cst_20 : f32 to vector<8x8xf32>
      %c0_i32_21 = arith.constant 0 : i32
      %22 = arith.addi %16, %c0_i32_21 : i32
      %23 = arith.index_cast %22 : i32 to index
      %c32 = arith.constant 32 : index
      %24 = vector.load %arg7[%23, %c32] : memref<16x96xf32, #tpu.memory_space<vmem>>, vector<8x8xf32>
      %25 = arith.index_cast %22 : i32 to index
      %c64 = arith.constant 64 : index
      %26 = vector.load %arg7[%25, %c64] : memref<16x96xf32, #tpu.memory_space<vmem>>, vector<8x8xf32>
      %cst_22 = arith.constant dense<0.000000e+00> : vector<8x8xf32>
      %27 = tpu.matmul %18, %24, %cst_22 {dimension_numbers = #tpu.dot_dimension_numbers<[1], [1], [0], [0], [0, 0, 1, 0], [], []>} : vector<8x8xf32>, vector<8x8xf32>, vector<8x8xf32> -> vector<8x8xf32>
      %cst_23 = arith.constant dense<0xFF800000> : vector<8xf32>
      %28 = vector.multi_reduction <maximumf>, %27, %cst_23 [1] : vector<8x8xf32> to vector<8xf32>
      %29 = vector.shape_cast %28 : vector<8xf32> to vector<8x1xf32>
      %30 = arith.maximumf %19, %29 : vector<8x1xf32>
      %31 = arith.subf %19, %30 : vector<8x1xf32>
      %32 = math.exp %31 : vector<8x1xf32>
      %33 = vector.broadcast %30 : vector<8x1xf32> to vector<8x8xf32>
      %34 = arith.subf %27, %33 : vector<8x8xf32>
      %35 = math.exp %34 : vector<8x8xf32>
      %36 = arith.mulf %32, %20 : vector<8x1xf32>
      %cst_24 = arith.constant dense<0.000000e+00> : vector<8xf32>
      %37 = vector.multi_reduction <add>, %35, %cst_24 [1] : vector<8x8xf32> to vector<8xf32>
      %38 = vector.shape_cast %37 : vector<8xf32> to vector<8x1xf32>
      %39 = arith.addf %36, %38 : vector<8x1xf32>
      %40 = vector.broadcast %32 : vector<8x1xf32> to vector<8x8xf32>
      %41 = arith.mulf %40, %21 : vector<8x8xf32>
      %cst_25 = arith.constant dense<0.000000e+00> : vector<8x8xf32>
      %42 = tpu.matmul %35, %26, %cst_25 {dimension_numbers = #tpu.dot_dimension_numbers<[1], [0], [0], [1], [0, 0, 1, 1], [], []>} : vector<8x8xf32>, vector<8x8xf32>, vector<8x8xf32> -> vector<8x8xf32>
      %43 = arith.addf %41, %42 : vector<8x8xf32>
      %44 = vector.broadcast %39 : vector<8x1xf32> to vector<8x8xf32>
      %45 = arith.divf %43, %44 : vector<8x8xf32>
      %46 = arith.index_cast %16 : i32 to index
      %c8 = arith.constant 8 : index
      %47 = vector.load %arg7[%46, %c8] : memref<16x96xf32, #tpu.memory_space<vmem>>, vector<8x8xf32>
      %cst_26 = arith.constant 0xFF800000 : f32
      %48 = vector.broadcast %cst_26 : f32 to vector<8x1xf32>
      %cst_27 = arith.constant 0.000000e+00 : f32
      %49 = vector.broadcast %cst_27 : f32 to vector<8x1xf32>
      %cst_28 = arith.constant 0.000000e+00 : f32
      %50 = vector.broadcast %cst_28 : f32 to vector<8x8xf32>
      %c0_i32_29 = arith.constant 0 : i32
      %51 = arith.addi %16, %c0_i32_29 : i32
      %52 = arith.index_cast %51 : i32 to index
      %c40 = arith.constant 40 : index
      %53 = vector.load %arg7[%52, %c40] : memref<16x96xf32, #tpu.memory_space<vmem>>, vector<8x8xf32>
      %54 = arith.index_cast %51 : i32 to index
      %c72 = arith.constant 72 : index
      %55 = vector.load %arg7[%54, %c72] : memref<16x96xf32, #tpu.memory_space<vmem>>, vector<8x8xf32>
      %cst_30 = arith.constant dense<0.000000e+00> : vector<8x8xf32>
      %56 = tpu.matmul %47, %53, %cst_30 {dimension_numbers = #tpu.dot_dimension_numbers<[1], [1], [0], [0], [0, 0, 1, 0], [], []>} : vector<8x8xf32>, vector<8x8xf32>, vector<8x8xf32> -> vector<8x8xf32>
      %cst_31 = arith.constant dense<0xFF800000> : vector<8xf32>
      %57 = vector.multi_reduction <maximumf>, %56, %cst_31 [1] : vector<8x8xf32> to vector<8xf32>
      %58 = vector.shape_cast %57 : vector<8xf32> to vector<8x1xf32>
      %59 = arith.maximumf %48, %58 : vector<8x1xf32>
      %60 = arith.subf %48, %59 : vector<8x1xf32>
      %61 = math.exp %60 : vector<8x1xf32>
      %62 = vector.broadcast %59 : vector<8x1xf32> to vector<8x8xf32>
      %63 = arith.subf %56, %62 : vector<8x8xf32>
      %64 = math.exp %63 : vector<8x8xf32>
      %65 = arith.mulf %61, %49 : vector<8x1xf32>
      %cst_32 = arith.constant dense<0.000000e+00> : vector<8xf32>
      %66 = vector.multi_reduction <add>, %64, %cst_32 [1] : vector<8x8xf32> to vector<8xf32>
      %67 = vector.shape_cast %66 : vector<8xf32> to vector<8x1xf32>
      %68 = arith.addf %65, %67 : vector<8x1xf32>
      %69 = vector.broadcast %61 : vector<8x1xf32> to vector<8x8xf32>
      %70 = arith.mulf %69, %50 : vector<8x8xf32>
      %cst_33 = arith.constant dense<0.000000e+00> : vector<8x8xf32>
      %71 = tpu.matmul %64, %55, %cst_33 {dimension_numbers = #tpu.dot_dimension_numbers<[1], [0], [0], [1], [0, 0, 1, 1], [], []>} : vector<8x8xf32>, vector<8x8xf32>, vector<8x8xf32> -> vector<8x8xf32>
      %72 = arith.addf %70, %71 : vector<8x8xf32>
      %73 = vector.broadcast %68 : vector<8x1xf32> to vector<8x8xf32>
      %74 = arith.divf %72, %73 : vector<8x8xf32>
      %75 = arith.index_cast %16 : i32 to index
      %c16 = arith.constant 16 : index
      %76 = vector.load %arg7[%75, %c16] : memref<16x96xf32, #tpu.memory_space<vmem>>, vector<8x8xf32>
      %cst_34 = arith.constant 0xFF800000 : f32
      %77 = vector.broadcast %cst_34 : f32 to vector<8x1xf32>
      %cst_35 = arith.constant 0.000000e+00 : f32
      %78 = vector.broadcast %cst_35 : f32 to vector<8x1xf32>
      %cst_36 = arith.constant 0.000000e+00 : f32
      %79 = vector.broadcast %cst_36 : f32 to vector<8x8xf32>
      %c0_i32_37 = arith.constant 0 : i32
      %80 = arith.addi %16, %c0_i32_37 : i32
      %81 = arith.index_cast %80 : i32 to index
      %c48 = arith.constant 48 : index
      %82 = vector.load %arg7[%81, %c48] : memref<16x96xf32, #tpu.memory_space<vmem>>, vector<8x8xf32>
      %83 = arith.index_cast %80 : i32 to index
      %c80 = arith.constant 80 : index
      %84 = vector.load %arg7[%83, %c80] : memref<16x96xf32, #tpu.memory_space<vmem>>, vector<8x8xf32>
      %cst_38 = arith.constant dense<0.000000e+00> : vector<8x8xf32>
      %85 = tpu.matmul %76, %82, %cst_38 {dimension_numbers = #tpu.dot_dimension_numbers<[1], [1], [0], [0], [0, 0, 1, 0], [], []>} : vector<8x8xf32>, vector<8x8xf32>, vector<8x8xf32> -> vector<8x8xf32>
      %cst_39 = arith.constant dense<0xFF800000> : vector<8xf32>
      %86 = vector.multi_reduction <maximumf>, %85, %cst_39 [1] : vector<8x8xf32> to vector<8xf32>
      %87 = vector.shape_cast %86 : vector<8xf32> to vector<8x1xf32>
      %88 = arith.maximumf %77, %87 : vector<8x1xf32>
      %89 = arith.subf %77, %88 : vector<8x1xf32>
      %90 = math.exp %89 : vector<8x1xf32>
      %91 = vector.broadcast %88 : vector<8x1xf32> to vector<8x8xf32>
      %92 = arith.subf %85, %91 : vector<8x8xf32>
      %93 = math.exp %92 : vector<8x8xf32>
      %94 = arith.mulf %90, %78 : vector<8x1xf32>
      %cst_40 = arith.constant dense<0.000000e+00> : vector<8xf32>
      %95 = vector.multi_reduction <add>, %93, %cst_40 [1] : vector<8x8xf32> to vector<8xf32>
      %96 = vector.shape_cast %95 : vector<8xf32> to vector<8x1xf32>
      %97 = arith.addf %94, %96 : vector<8x1xf32>
      %98 = vector.broadcast %90 : vector<8x1xf32> to vector<8x8xf32>
      %99 = arith.mulf %98, %79 : vector<8x8xf32>
      %cst_41 = arith.constant dense<0.000000e+00> : vector<8x8xf32>
      %100 = tpu.matmul %93, %84, %cst_41 {dimension_numbers = #tpu.dot_dimension_numbers<[1], [0], [0], [1], [0, 0, 1, 1], [], []>} : vector<8x8xf32>, vector<8x8xf32>, vector<8x8xf32> -> vector<8x8xf32>
      %101 = arith.addf %99, %100 : vector<8x8xf32>
      %102 = vector.broadcast %97 : vector<8x1xf32> to vector<8x8xf32>
      %103 = arith.divf %101, %102 : vector<8x8xf32>
      %104 = arith.index_cast %16 : i32 to index
      %c24 = arith.constant 24 : index
      %105 = vector.load %arg7[%104, %c24] : memref<16x96xf32, #tpu.memory_space<vmem>>, vector<8x8xf32>
      %cst_42 = arith.constant 0xFF800000 : f32
      %106 = vector.broadcast %cst_42 : f32 to vector<8x1xf32>
      %cst_43 = arith.constant 0.000000e+00 : f32
      %107 = vector.broadcast %cst_43 : f32 to vector<8x1xf32>
      %cst_44 = arith.constant 0.000000e+00 : f32
      %108 = vector.broadcast %cst_44 : f32 to vector<8x8xf32>
      %c0_i32_45 = arith.constant 0 : i32
      %109 = arith.addi %16, %c0_i32_45 : i32
      %110 = arith.index_cast %109 : i32 to index
      %c56 = arith.constant 56 : index
      %111 = vector.load %arg7[%110, %c56] : memref<16x96xf32, #tpu.memory_space<vmem>>, vector<8x8xf32>
      %112 = arith.index_cast %109 : i32 to index
      %c88 = arith.constant 88 : index
      %113 = vector.load %arg7[%112, %c88] : memref<16x96xf32, #tpu.memory_space<vmem>>, vector<8x8xf32>
      %cst_46 = arith.constant dense<0.000000e+00> : vector<8x8xf32>
      %114 = tpu.matmul %105, %111, %cst_46 {dimension_numbers = #tpu.dot_dimension_numbers<[1], [1], [0], [0], [0, 0, 1, 0], [], []>} : vector<8x8xf32>, vector<8x8xf32>, vector<8x8xf32> -> vector<8x8xf32>
      %cst_47 = arith.constant dense<0xFF800000> : vector<8xf32>
      %115 = vector.multi_reduction <maximumf>, %114, %cst_47 [1] : vector<8x8xf32> to vector<8xf32>
      %116 = vector.shape_cast %115 : vector<8xf32> to vector<8x1xf32>
      %117 = arith.maximumf %106, %116 : vector<8x1xf32>
      %118 = arith.subf %106, %117 : vector<8x1xf32>
      %119 = math.exp %118 : vector<8x1xf32>
      %120 = vector.broadcast %117 : vector<8x1xf32> to vector<8x8xf32>
      %121 = arith.subf %114, %120 : vector<8x8xf32>
      %122 = math.exp %121 : vector<8x8xf32>
      %123 = arith.mulf %119, %107 : vector<8x1xf32>
      %cst_48 = arith.constant dense<0.000000e+00> : vector<8xf32>
      %124 = vector.multi_reduction <add>, %122, %cst_48 [1] : vector<8x8xf32> to vector<8xf32>
      %125 = vector.shape_cast %124 : vector<8xf32> to vector<8x1xf32>
      %126 = arith.addf %123, %125 : vector<8x1xf32>
      %127 = vector.broadcast %119 : vector<8x1xf32> to vector<8x8xf32>
      %128 = arith.mulf %127, %108 : vector<8x8xf32>
      %cst_49 = arith.constant dense<0.000000e+00> : vector<8x8xf32>
      %129 = tpu.matmul %122, %113, %cst_49 {dimension_numbers = #tpu.dot_dimension_numbers<[1], [0], [0], [1], [0, 0, 1, 1], [], []>} : vector<8x8xf32>, vector<8x8xf32>, vector<8x8xf32> -> vector<8x8xf32>
      %130 = arith.addf %128, %129 : vector<8x8xf32>
      %131 = vector.broadcast %126 : vector<8x1xf32> to vector<8x8xf32>
      %132 = arith.divf %130, %131 : vector<8x8xf32>
      %133 = tpu.concatenate %45, %74, %103, %132 in 1 : vector<8x8xf32>, vector<8x8xf32>, vector<8x8xf32>, vector<8x8xf32> -> vector<8x32xf32>
      %134 = arith.index_cast %16 : i32 to index
      %c0_50 = arith.constant 0 : index
      %135 = vector.load %arg8[%134, %c0_50] : memref<16x32xf32, #tpu.memory_space<vmem>>, vector<8x32xf32>
      tpu.vector_store %arg8[%134, %c0_50], %133 {strides = array<i32>} : memref<16x32xf32, #tpu.memory_space<vmem>>, vector<8x32xf32>,
    }
    %c2_i32_7 = arith.constant 2 : i32
    %c0_8 = arith.constant 0 : index
    %c0_9 = arith.constant 0 : index
    %8 = vector.load %arg8[%c0_8, %c0_9] : memref<16x32xf32, #tpu.memory_space<vmem>>, vector<16x32xf32>
    %c0_10 = arith.constant 0 : index
    %c0_11 = arith.constant 0 : index
    %9 = vector.load %arg4[%c0_10, %c0_11] : memref<32x32xf32, #tpu.memory_space<vmem>>, vector<32x32xf32>
    %cst_12 = arith.constant dense<0.000000e+00> : vector<16x32xf32>
    %10 = tpu.matmul %8, %9, %cst_12 {dimension_numbers = #tpu.dot_dimension_numbers<[1], [0], [0], [1], [0, 0, 1, 1], [], []>} : vector<16x32xf32>, vector<32x32xf32>, vector<16x32xf32> -> vector<16x32xf32>
    %c0_13 = arith.constant 0 : index
    %c0_14 = arith.constant 0 : index
    %11 = vector.load %arg5[%c0_13, %c0_14] : memref<1x32xf32, #tpu.memory_space<vmem>>, vector<1x32xf32>
    %12 = vector.broadcast %11 : vector<1x32xf32> to vector<16x32xf32>
    %13 = arith.addf %10, %12 : vector<16x32xf32>
    %c0_15 = arith.constant 0 : index
    %c0_16 = arith.constant 0 : index
    %14 = vector.load %arg6[%c0_15, %c0_16] : memref<16x32xf32, #tpu.memory_space<vmem>>, vector<16x32xf32>
    tpu.vector_store %arg6[%c0_15, %c0_16], %13 {strides = array<i32>} : memref<16x32xf32, #tpu.memory_space<vmem>>, vector<16x32xf32>,
    return
  }
  func.func @transform_0(%arg0: i32) -> (i32, i32) {
    %c0_i32 = arith.constant 0 : i32
    %c0_i32_0 = arith.constant 0 : i32
    return %arg0, %c0_i32 : i32, i32
  }
  func.func @transform_1(%arg0: i32) -> (i32, i32) {
    %c0_i32 = arith.constant 0 : i32
    %c0_i32_0 = arith.constant 0 : i32
    %c0_i32_1 = arith.constant 0 : i32
    return %c0_i32, %c0_i32_0 : i32, i32
  }
  func.func @transform_2(%arg0: i32) -> (i32, i32) {
    %c0_i32 = arith.constant 0 : i32
    %c0_i32_0 = arith.constant 0 : i32
    %c0_i32_1 = arith.constant 0 : i32
    return %c0_i32, %c0_i32_0 : i32, i32
  }
  func.func @transform_3(%arg0: i32) -> (i32, i32) {
    %c0_i32 = arith.constant 0 : i32
    %c0_i32_0 = arith.constant 0 : i32
    %c0_i32_1 = arith.constant 0 : i32
    return %c0_i32, %c0_i32_0 : i32, i32
  }
  func.func @transform_4(%arg0: i32) -> (i32, i32) {
    %c0_i32 = arith.constant 0 : i32
    %c0_i32_0 = arith.constant 0 : i32
    %c0_i32_1 = arith.constant 0 : i32
    return %c0_i32, %c0_i32_0 : i32, i32
  }
  func.func @transform_5(%arg0: i32) -> (i32, i32) {
    %c0_i32 = arith.constant 0 : i32
    %c0_i32_0 = arith.constant 0 : i32
    return %arg0, %c0_i32 : i32, i32
  }
}

</mosaic_0001>

<llo_original>
// kernel: tpu_custom_call.1
$region0: #{tpu_custom_call.1}
  #allocation0 [shape = 'u32[]', space=smem, size = 0x4, offset = 0x4, fixed_abs, tag = 'smem constant byte address 0x4 - core index']
  #allocation1 [shape = 'u32[144,128]{1,0:T(1,128)}', space=vmem, size = 0x12000, scoped, tag = 'internal scratch']
  #allocation2 [shape = 'f32[16,96]{1,0:T(8,128)}', space=vmem, size = 0x2000, scoped, tag = 'scratch operand']
  #allocation3 [shape = 'f32[16,32]{1,0:T(8,128)}', space=vmem, size = 0x2000, scoped, tag = 'scratch operand']
  %s0 = inlined_call_operand.hbm [shape: f32[16,32], index: 0, kind: input, shape index: {}]
  %s1 = inlined_call_operand.hbm [shape: f32[32,96], index: 1, kind: input, shape index: {}]
  %s2 = inlined_call_operand.vmem [shape: f32[1,96], index: 2, kind: input, shape index: {}]
  %s3 = inlined_call_operand.hbm [shape: f32[32,32], index: 3, kind: input, shape index: {}]
  %s4 = inlined_call_operand.vmem [shape: f32[1,32], index: 4, kind: input, shape index: {}]
  %s5 = inlined_call_operand.hbm [shape: f32[16,32], index: 5, kind: output, shape index: {}]
  %s6 = sld [smem:[#allocation0]]
  $region49: #{tpu_custom_call.1} parent=0
    _
  %s8 = ssub.s32 1, %s6
  %s9 = scalar_select 0, %s8, %s6
  $region1: #{tpu_custom_call.1} parent=0
    #allocation4 [shape = 'u8[8192]{0}', space=vmem, size = 0x2000, scoped, tag = 'input window, operand 0, single buffered']
    #allocation5 [shape = 's32[1]{0}', space=sflag, size = 0x4, scoped, tag = 'scoped memory for tpu_custom_call.1']
    #allocation6 [shape = 's32[1]{0}', space=sflag, size = 0x4, scoped, tag = 'scoped memory for tpu_custom_call.1']
    #allocation7 [shape = 'u8[16384]{0}', space=vmem, size = 0x4000, scoped, tag = 'input window, operand 1, single buffered']
    #allocation8 [shape = 's32[1]{0}', space=sflag, size = 0x4, scoped, tag = 'scoped memory for tpu_custom_call.1']
    #allocation9 [shape = 'u8[16384]{0}', space=vmem, size = 0x4000, scoped, tag = 'input window, operand 3, single buffered']
    #allocation10 [shape = 'u8[8192]{0}', space=vmem, size = 0x2000, scoped, tag = 'output window, operand 0, single buffered']
    %10 = vsyncpa [#allocation5], 0
    %11 = vsyncpa [#allocation8], 0
    %12 = vsyncpa [#allocation6], 0
    // Predicated region
    $region2: #{tpu_custom_call.1} parent=1 // pred_check
      _
    $region3: #{tpu_custom_call.1} parent=1 // pred_check_branch
      %14 = sbr.rel (0) target = $region5
    $region4: #{tpu_custom_call.1} parent=1 // pred_region
      %s16 = ssub.s32 256, 256
      %17 = vsyncadd [#allocation5], %s16
      %s18 = sshll.u32 [#allocation4], 4
      %s19 = int_to_ptr.vmem [resolvable:$true] %s18
      %24 = dma.hbm_to_vmem [thread:$0]  %s0, 256, %s19, [#allocation5], 128, 128, 8
    $region5: #{tpu_custom_call.1} parent=1 // pred_fallthru
      _
    // Predicated region
    $region6: #{tpu_custom_call.1} parent=1 // pred_check
      _
    $region7: #{tpu_custom_call.1} parent=1 // pred_check_branch
      %26 = sbr.rel (0) target = $region9
    $region8: #{tpu_custom_call.1} parent=1 // pred_region
      %s28 = ssub.s32 512, 512
      %29 = vsyncadd [#allocation8], %s28
      %s30 = sshll.u32 [#allocation7], 4
      %s31 = int_to_ptr.vmem [resolvable:$true] %s30
      %36 = dma.hbm_to_vmem [thread:$0]  %s1, 512, %s31, [#allocation8], 128, 128, 8
    $region9: #{tpu_custom_call.1} parent=1 // pred_fallthru
      _
    // Predicated region
    $region10: #{tpu_custom_call.1} parent=1 // pred_check
      _
    $region11: #{tpu_custom_call.1} parent=1 // pred_check_branch
      %38 = sbr.rel (0) target = $region13
    $region12: #{tpu_custom_call.1} parent=1 // pred_region
      _
    $region13: #{tpu_custom_call.1} parent=1 // pred_fallthru
      _
    // Predicated region
    $region14: #{tpu_custom_call.1} parent=1 // pred_check
      _
    $region15: #{tpu_custom_call.1} parent=1 // pred_check_branch
      %40 = sbr.rel (0) target = $region17
    $region16: #{tpu_custom_call.1} parent=1 // pred_region
      %s42 = ssub.s32 512, 512
      %43 = vsyncadd [#allocation8], %s42
      %s44 = sshll.u32 [#allocation9], 4
      %s45 = int_to_ptr.vmem [resolvable:$true] %s44
      %50 = dma.hbm_to_vmem [thread:$0]  %s3, 512, %s45, [#allocation8], 128, 128, 8
    $region17: #{tpu_custom_call.1} parent=1 // pred_fallthru
      _
    // Predicated region
    $region18: #{tpu_custom_call.1} parent=1 // pred_check
      _
    $region19: #{tpu_custom_call.1} parent=1 // pred_check_branch
      %52 = sbr.rel (0) target = $region21
    $region20: #{tpu_custom_call.1} parent=1 // pred_region
      _
    $region21: #{tpu_custom_call.1} parent=1 // pred_fallthru
      _
    // Predicated region
    $region22: #{tpu_custom_call.1} parent=1 // pred_check
      _
    $region23: #{tpu_custom_call.1} parent=1 // pred_check_branch
      %54 = sbr.rel (0) target = $region25
    $region24: #{tpu_custom_call.1} parent=1 // pred_region
      %55 = dma.done [#allocation5], 256
    $region25: #{tpu_custom_call.1} parent=1 // pred_fallthru
      _
    // Predicated region
    $region26: #{tpu_custom_call.1} parent=1 // pred_check
      _
    $region27: #{tpu_custom_call.1} parent=1 // pred_check_branch
      %57 = sbr.rel (0) target = $region29
    $region28: #{tpu_custom_call.1} parent=1 // pred_region
      %58 = dma.done [#allocation8], 512
    $region29: #{tpu_custom_call.1} parent=1 // pred_fallthru
      _
    // Predicated region
    $region30: #{tpu_custom_call.1} parent=1 // pred_check
      _
    $region31: #{tpu_custom_call.1} parent=1 // pred_check_branch
      %60 = sbr.rel (0) target = $region33
    $region32: #{tpu_custom_call.1} parent=1 // pred_region
      %61 = dma.done [#allocation8], 512
    $region33: #{tpu_custom_call.1} parent=1 // pred_fallthru
      _
    %v62 = vld [vmem:[#allocation4] sm:$0xff]
    %v63 = vld [vmem:[#allocation4 + $0x8] sm:$0xff]
    %v64 = vld [vmem:[#allocation7] sm:$0xff]
    %v65 = vld [vmem:[#allocation7 + $0x8] sm:$0xff]
    %v66 = vld [vmem:[#allocation7 + $0x10] sm:$0xff]
    %v67 = vld [vmem:[#allocation7 + $0x18] sm:$0xff]
    %v68 = vld [vmem:[%s2] sm:$0x1]
    %v70 = vlaneseq
    %v71 = vshrl.u32 %v70, 7
    %v72 = vsub.s32 0, %v71
    %v73 = vrot.slane %v68, %v72
    %vm75 = vcmask 261120
    %v77 = vsel %vm75, %v62, 0
    %v80 = vsel %vm75, %v63, 0
    %82 = vmatprep.subr.mxu0 0.0
    %83 = vmatpush1.msra.mxu0 0.0
    %84 = vmatprep.subr.mxu0 0.0
    %85 = vmatpush1.msra.mxu0 0.0
    %86 = vmatprep.subr.mxu0 0.0
    %87 = vmatpush1.msra.mxu0 0.0
    %88 = vmatprep.subr.mxu0 0.0
    %89 = vmatpush1.msra.mxu0 0.0
    %90 = vmatprep.subr.mxu0 0.0
    %91 = vmatpush1.msra.mxu0 0.0
    %92 = vmatprep.subr.mxu0 0.0
    %93 = vmatpush1.msra.mxu0 0.0
    %94 = vmatprep.subr.mxu0 0.0
    %95 = vmatpush1.msra.mxu0 0.0
    %96 = vmatprep.subr.mxu0 0.0
    %97 = vmatpush1.msra.mxu0 0.0
    %98 = vmatprep.subr.mxu0 0.0
    %99 = vmatpush1.msra.mxu0 0.0
    %100 = vmatprep.subr.mxu0 0.0
    %101 = vmatpush1.msra.mxu0 0.0
    %102 = vmatprep.subr.mxu0 0.0
    %103 = vmatpush1.msra.mxu0 0.0
    %104 = vmatprep.subr.mxu0 0.0
    %105 = vmatpush1.msra.mxu0 0.0
    %106 = vmatprep.subr.mxu0 0.0
    %107 = vmatpush1.msra.mxu0 %v67
    %108 = vmatprep.subr.mxu0 0.0
    %109 = vmatpush1.msra.mxu0 %v66
    %110 = vmatprep.subr.mxu0 0.0
    %111 = vmatpush1.msra.mxu0 %v65
    %112 = vmatprep.subr.mxu0 0.0
    %113 = vmatpush1.msra.mxu0 %v64
    %114 = vmatprep.subr.mxu0 0.0
    %115 = vmatpush2.msra.mxu0 0.0
    %116 = vmatprep.subr.mxu0 0.0
    %117 = vmatpush2.msra.mxu0 0.0
    %118 = vmatprep.subr.mxu0 0.0
    %119 = vmatpush2.msra.mxu0 0.0
    %120 = vmatprep.subr.mxu0 0.0
    %121 = vmatpush2.msra.mxu0 0.0
    %122 = vmatprep.subr.mxu0 0.0
    %123 = vmatpush2.msra.mxu0 0.0
    %124 = vmatprep.subr.mxu0 0.0
    %125 = vmatpush2.msra.mxu0 0.0
    %126 = vmatprep.subr.mxu0 0.0
    %127 = vmatpush2.msra.mxu0 0.0
    %128 = vmatprep.subr.mxu0 0.0
    %129 = vmatpush2.msra.mxu0 0.0
    %130 = vmatprep.subr.mxu0 0.0
    %131 = vmatpush2.msra.mxu0 0.0
    %132 = vmatprep.subr.mxu0 0.0
    %133 = vmatpush2.msra.mxu0 0.0
    %134 = vmatprep.subr.mxu0 0.0
    %135 = vmatpush2.msra.mxu0 0.0
    %136 = vmatprep.subr.mxu0 0.0
    %137 = vmatpush2.msra.mxu0 0.0
    %138 = vmatprep.subr.mxu0 0.0
    %139 = vmatpush2.msra.mxu0 0.0
    %140 = vmatprep.subr.mxu0 0.0
    %141 = vmatpush2.msra.mxu0 0.0
    %142 = vmatprep.subr.mxu0 0.0
    %143 = vmatpush2.msra.mxu0 0.0
    %144 = vmatprep.subr.mxu0 0.0
    %145 = vmatpush2.msra.mxu0 0.0
    %146 = vmatprep.mubr.f32.mxu0 0.0
    %147 = vmatmul.mubr.f32.gmra.mxu0 %v77
    %v148 = vpop.f32.mrf.mxu0
    %v149 = vadd.f32 %v73, %v148
    %v150 = vpop.f32.mrf.mxu0
    %151 = vmatprep.mubr.f32.mxu0 0.0
    %152 = vmatmul.mubr.f32.gmra.mxu0 %v80
    %v153 = vpop.f32.mrf.mxu0
    %v154 = vadd.f32 %v73, %v153
    %v155 = vpop.f32.mrf.mxu0
    %156 = vdwg.mxu0
    %vm157 = vcmask 785408
    %158 = vst.msk [vmem:[#allocation2] sm:$0xff] %vm157, %v149
    %159 = vst.msk [vmem:[#allocation2 + $0x8] sm:$0xff] %vm157, %v154
    loop: start=0, step=1, limit=2
    $region34: #{tpu_custom_call.1} parent=1 // loop_pre_header
      _
    $region35: #{tpu_custom_call.1} parent=1 // loop_header
      %s161 = sphi 0, %s165
      %p162 = scmp.ge.s32.totalorder %s161, 2
    $region36: #{tpu_custom_call.1} parent=1 // loop_header_branch
      %164 = sbr.rel (%p162) target = $region40
    $region37: #{tpu_custom_call.1} parent=1 // loop_body
      %s166 = smul.u32 %s161, 8
      %s167 = scalar_lea.vmem [#allocation2], %s166
      %v168 = vld [vmem:[%s167] sm:$0xff]
      %170 = vrot.lane.b32.xlu0 %v168, 96
      %v171 = vpop.permute.xlu0 %170
      %vm172 = vcmask 64512
      %v173 = vsel %vm172, %v168, 0
      %v175 = vsel %vm172, %v171, 0
      %177 = vmatprep.subr.mxu0 0.0
      %178 = vmatpush1.xpose.msra.mxu0 0.0
      %179 = vmatprep.subr.mxu0 0.0
      %180 = vmatpush1.xpose.msra.mxu0 0.0
      %181 = vmatprep.subr.mxu0 0.0
      %182 = vmatpush1.xpose.msra.mxu0 0.0
      %183 = vmatprep.subr.mxu0 0.0
      %184 = vmatpush1.xpose.msra.mxu0 0.0
      %185 = vmatprep.subr.mxu0 0.0
      %186 = vmatpush1.xpose.msra.mxu0 0.0
      %187 = vmatprep.subr.mxu0 0.0
      %188 = vmatpush1.xpose.msra.mxu0 0.0
      %189 = vmatprep.subr.mxu0 0.0
      %190 = vmatpush1.xpose.msra.mxu0 0.0
      %191 = vmatprep.subr.mxu0 0.0
      %192 = vmatpush1.xpose.msra.mxu0 0.0
      %193 = vmatprep.subr.mxu0 0.0
      %194 = vmatpush1.xpose.msra.mxu0 0.0
      %195 = vmatprep.subr.mxu0 0.0
      %196 = vmatpush1.xpose.msra.mxu0 0.0
      %197 = vmatprep.subr.mxu0 0.0
      %198 = vmatpush1.xpose.msra.mxu0 0.0
      %199 = vmatprep.subr.mxu0 0.0
      %200 = vmatpush1.xpose.msra.mxu0 0.0
      %201 = vmatprep.subr.mxu0 0.0
      %202 = vmatpush1.xpose.msra.mxu0 0.0
      %203 = vmatprep.subr.mxu0 0.0
      %204 = vmatpush1.xpose.msra.mxu0 0.0
      %205 = vmatprep.subr.mxu0 0.0
      %206 = vmatpush1.xpose.msra.mxu0 0.0
      %207 = vmatprep.subr.mxu0 0.0
      %208 = vmatpush1.xpose.msra.mxu0 %v175
      %209 = vmatprep.subr.mxu0 0.0
      %210 = vmatpush2.xpose.msra.mxu0 0.0
      %211 = vmatprep.subr.mxu0 0.0
      %212 = vmatpush2.xpose.msra.mxu0 0.0
      %213 = vmatprep.subr.mxu0 0.0
      %214 = vmatpush2.xpose.msra.mxu0 0.0
      %215 = vmatprep.subr.mxu0 0.0
      %216 = vmatpush2.xpose.msra.mxu0 0.0
      %217 = vmatprep.subr.mxu0 0.0
      %218 = vmatpush2.xpose.msra.mxu0 0.0
      %219 = vmatprep.subr.mxu0 0.0
      %220 = vmatpush2.xpose.msra.mxu0 0.0
      %221 = vmatprep.subr.mxu0 0.0
      %222 = vmatpush2.xpose.msra.mxu0 0.0
      %223 = vmatprep.subr.mxu0 0.0
      %224 = vmatpush2.xpose.msra.mxu0 0.0
      %225 = vmatprep.subr.mxu0 0.0
      %226 = vmatpush2.xpose.msra.mxu0 0.0
      %227 = vmatprep.subr.mxu0 0.0
      %228 = vmatpush2.xpose.msra.mxu0 0.0
      %229 = vmatprep.subr.mxu0 0.0
      %230 = vmatpush2.xpose.msra.mxu0 0.0
      %231 = vmatprep.subr.mxu0 0.0
      %232 = vmatpush2.xpose.msra.mxu0 0.0
      %233 = vmatprep.subr.mxu0 0.0
      %234 = vmatpush2.xpose.msra.mxu0 0.0
      %235 = vmatprep.subr.mxu0 0.0
      %236 = vmatpush2.xpose.msra.mxu0 0.0
      %237 = vmatprep.subr.mxu0 0.0
      %238 = vmatpush2.xpose.msra.mxu0 0.0
      %239 = vmatprep.subr.mxu0 0.0
      %240 = vmatpush2.xpose.msra.mxu0 0.0
      %241 = vmatprep.mubr.f32.mxu0 0.0
      %242 = vmatmul.mubr.f32.gmra.mxu0 %v173
      %v243 = vpop.f32.mrf.mxu0
      %v244 = vadd.f32 0.0, %v243
      %v245 = vpop.f32.mrf.mxu0
      %246 = vdwg.mxu0
      %v247 = vsel %vm172, %v244, -inf
      %248 = vmax.xlane.f32.xlu0 %v247
      %v249 = vpop.xlane.xlu0 %248
      %v250 = vsub.f32 -inf, %v249
      %v251 = vmul.f32 %v250, 1.442695
      %v252 = vpow.pop %v251
      %v253 = vsub.f32 %v244, %v249
      %v254 = vmul.f32 %v253, 1.442695
      %v255 = vpow.pop %v254
      %v256 = vmul.f32 %v252, 0.0
      %v257 = vsel %vm172, %v255, 0.0
      %258 = vadd.xlane.f32.xlu0 %v257
      %v259 = vpop.xlane.xlu0 %258
      %v260 = vadd.f32 %v256, %v259
      %261 = vrot.lane.b32.xlu0 %v168, 64
      %v262 = vpop.permute.xlu0 %261
      %v265 = vsel %vm172, %v255, 0
      %267 = vmatprep.subr.mxu0 0.0
      %268 = vmatpush1.msra.mxu0 0.0
      %269 = vmatprep.subr.mxu0 0.0
      %270 = vmatpush1.msra.mxu0 0.0
      %271 = vmatprep.subr.mxu0 0.0
      %272 = vmatpush1.msra.mxu0 0.0
      %273 = vmatprep.subr.mxu0 0.0
      %274 = vmatpush1.msra.mxu0 0.0
      %275 = vmatprep.subr.mxu0 0.0
      %276 = vmatpush1.msra.mxu0 0.0
      %277 = vmatprep.subr.mxu0 0.0
      %278 = vmatpush1.msra.mxu0 0.0
      %279 = vmatprep.subr.mxu0 0.0
      %280 = vmatpush1.msra.mxu0 0.0
      %281 = vmatprep.subr.mxu0 0.0
      %282 = vmatpush1.msra.mxu0 0.0
      %283 = vmatprep.subr.mxu0 0.0
      %284 = vmatpush1.msra.mxu0 0.0
      %285 = vmatprep.subr.mxu0 0.0
      %286 = vmatpush1.msra.mxu0 0.0
      %287 = vmatprep.subr.mxu0 0.0
      %288 = vmatpush1.msra.mxu0 0.0
      %289 = vmatprep.subr.mxu0 0.0
      %290 = vmatpush1.msra.mxu0 0.0
      %291 = vmatprep.subr.mxu0 0.0
      %292 = vmatpush1.msra.mxu0 0.0
      %293 = vmatprep.subr.mxu0 0.0
      %294 = vmatpush1.msra.mxu0 0.0
      %295 = vmatprep.subr.mxu0 0.0
      %296 = vmatpush1.msra.mxu0 0.0
      %297 = vmatprep.subr.mxu0 0.0
      %298 = vmatpush1.msra.mxu0 %v262
      %299 = vmatprep.subr.mxu0 0.0
      %300 = vmatpush2.msra.mxu0 0.0
      %301 = vmatprep.subr.mxu0 0.0
      %302 = vmatpush2.msra.mxu0 0.0
      %303 = vmatprep.subr.mxu0 0.0
      %304 = vmatpush2.msra.mxu0 0.0
      %305 = vmatprep.subr.mxu0 0.0
      %306 = vmatpush2.msra.mxu0 0.0
      %307 = vmatprep.subr.mxu0 0.0
      %308 = vmatpush2.msra.mxu0 0.0
      %309 = vmatprep.subr.mxu0 0.0
      %310 = vmatpush2.msra.mxu0 0.0
      %311 = vmatprep.subr.mxu0 0.0
      %312 = vmatpush2.msra.mxu0 0.0
      %313 = vmatprep.subr.mxu0 0.0
      %314 = vmatpush2.msra.mxu0 0.0
      %315 = vmatprep.subr.mxu0 0.0
      %316 = vmatpush2.msra.mxu0 0.0
      %317 = vmatprep.subr.mxu0 0.0
      %318 = vmatpush2.msra.mxu0 0.0
      %319 = vmatprep.subr.mxu0 0.0
      %320 = vmatpush2.msra.mxu0 0.0
      %321 = vmatprep.subr.mxu0 0.0
      %322 = vmatpush2.msra.mxu0 0.0
      %323 = vmatprep.subr.mxu0 0.0
      %324 = vmatpush2.msra.mxu0 0.0
      %325 = vmatprep.subr.mxu0 0.0
      %326 = vmatpush2.msra.mxu0 0.0
      %327 = vmatprep.subr.mxu0 0.0
      %328 = vmatpush2.msra.mxu0 0.0
      %329 = vmatprep.subr.mxu0 0.0
      %330 = vmatpush2.msra.mxu0 0.0
      %331 = vmatprep.mubr.f32.mxu0 0.0
      %332 = vmatmul.mubr.f32.gmra.mxu0 %v265
      %v333 = vpop.f32.mrf.mxu0
      %v334 = vadd.f32 0.0, %v333
      %v335 = vpop.f32.mrf.mxu0
      %336 = vdwg.mxu0
      %v337 = vadd.f32 %v256, %v334
      %v338 = vrcp.pop %v260
      %v339 = vmul.f32 %v337, %v338
      %340 = vrot.lane.b32.xlu0 %v168, 120
      %v341 = vpop.permute.xlu0 %340
      %342 = vrot.lane.b32.xlu0 %v168, 88
      %v343 = vpop.permute.xlu0 %342
      %v344 = vsel %vm172, %v341, 0
      %v346 = vsel %vm172, %v343, 0
      %348 = vmatprep.subr.mxu0 0.0
      %349 = vmatpush1.xpose.msra.mxu0 0.0
      %350 = vmatprep.subr.mxu0 0.0
      %351 = vmatpush1.xpose.msra.mxu0 0.0
      %352 = vmatprep.subr.mxu0 0.0
      %353 = vmatpush1.xpose.msra.mxu0 0.0
      %354 = vmatprep.subr.mxu0 0.0
      %355 = vmatpush1.xpose.msra.mxu0 0.0
      %356 = vmatprep.subr.mxu0 0.0
      %357 = vmatpush1.xpose.msra.mxu0 0.0
      %358 = vmatprep.subr.mxu0 0.0
      %359 = vmatpush1.xpose.msra.mxu0 0.0
      %360 = vmatprep.subr.mxu0 0.0
      %361 = vmatpush1.xpose.msra.mxu0 0.0
      %362 = vmatprep.subr.mxu0 0.0
      %363 = vmatpush1.xpose.msra.mxu0 0.0
      %364 = vmatprep.subr.mxu0 0.0
      %365 = vmatpush1.xpose.msra.mxu0 0.0
      %366 = vmatprep.subr.mxu0 0.0
      %367 = vmatpush1.xpose.msra.mxu0 0.0
      %368 = vmatprep.subr.mxu0 0.0
      %369 = vmatpush1.xpose.msra.mxu0 0.0
      %370 = vmatprep.subr.mxu0 0.0
      %371 = vmatpush1.xpose.msra.mxu0 0.0
      %372 = vmatprep.subr.mxu0 0.0
      %373 = vmatpush1.xpose.msra.mxu0 0.0
      %374 = vmatprep.subr.mxu0 0.0
      %375 = vmatpush1.xpose.msra.mxu0 0.0
      %376 = vmatprep.subr.mxu0 0.0
      %377 = vmatpush1.xpose.msra.mxu0 0.0
      %378 = vmatprep.subr.mxu0 0.0
      %379 = vmatpush1.xpose.msra.mxu0 %v346
      %380 = vmatprep.subr.mxu0 0.0
      %381 = vmatpush2.xpose.msra.mxu0 0.0
      %382 = vmatprep.subr.mxu0 0.0
      %383 = vmatpush2.xpose.msra.mxu0 0.0
      %384 = vmatprep.subr.mxu0 0.0
      %385 = vmatpush2.xpose.msra.mxu0 0.0
      %386 = vmatprep.subr.mxu0 0.0
      %387 = vmatpush2.xpose.msra.mxu0 0.0
      %388 = vmatprep.subr.mxu0 0.0
      %389 = vmatpush2.xpose.msra.mxu0 0.0
      %390 = vmatprep.subr.mxu0 0.0
      %391 = vmatpush2.xpose.msra.mxu0 0.0
      %392 = vmatprep.subr.mxu0 0.0
      %393 = vmatpush2.xpose.msra.mxu0 0.0
      %394 = vmatprep.subr.mxu0 0.0
      %395 = vmatpush2.xpose.msra.mxu0 0.0
      %396 = vmatprep.subr.mxu0 0.0
      %397 = vmatpush2.xpose.msra.mxu0 0.0
      %398 = vmatprep.subr.mxu0 0.0
      %399 = vmatpush2.xpose.msra.mxu0 0.0
      %400 = vmatprep.subr.mxu0 0.0
      %401 = vmatpush2.xpose.msra.mxu0 0.0
      %402 = vmatprep.subr.mxu0 0.0
      %403 = vmatpush2.xpose.msra.mxu0 0.0
      %404 = vmatprep.subr.mxu0 0.0
      %405 = vmatpush2.xpose.msra.mxu0 0.0
      %406 = vmatprep.subr.mxu0 0.0
      %407 = vmatpush2.xpose.msra.mxu0 0.0
      %408 = vmatprep.subr.mxu0 0.0
      %409 = vmatpush2.xpose.msra.mxu0 0.0
      %410 = vmatprep.subr.mxu0 0.0
      %411 = vmatpush2.xpose.msra.mxu0 0.0
      %412 = vmatprep.mubr.f32.mxu0 0.0
      %413 = vmatmul.mubr.f32.gmra.mxu0 %v344
      %v414 = vpop.f32.mrf.mxu0
      %v415 = vadd.f32 0.0, %v414
      %v416 = vpop.f32.mrf.mxu0
      %417 = vdwg.mxu0
      %v418 = vsel %vm172, %v415, -inf
      %419 = vmax.xlane.f32.xlu0 %v418
      %v420 = vpop.xlane.xlu0 %419
      %v421 = vsub.f32 -inf, %v420
      %v422 = vmul.f32 %v421, 1.442695
      %v423 = vpow.pop %v422
      %v424 = vsub.f32 %v415, %v420
      %v425 = vmul.f32 %v424, 1.442695
      %v426 = vpow.pop %v425
      %v427 = vmul.f32 %v423, 0.0
      %v428 = vsel %vm172, %v426, 0.0
      %429 = vadd.xlane.f32.xlu0 %v428
      %v430 = vpop.xlane.xlu0 %429
      %v431 = vadd.f32 %v427, %v430
      %432 = vrot.lane.b32.xlu0 %v168, 56
      %v433 = vpop.permute.xlu0 %432
      %v436 = vsel %vm172, %v426, 0
      %438 = vmatprep.subr.mxu0 0.0
      %439 = vmatpush1.msra.mxu0 0.0
      %440 = vmatprep.subr.mxu0 0.0
      %441 = vmatpush1.msra.mxu0 0.0
      %442 = vmatprep.subr.mxu0 0.0
      %443 = vmatpush1.msra.mxu0 0.0
      %444 = vmatprep.subr.mxu0 0.0
      %445 = vmatpush1.msra.mxu0 0.0
      %446 = vmatprep.subr.mxu0 0.0
      %447 = vmatpush1.msra.mxu0 0.0
      %448 = vmatprep.subr.mxu0 0.0
      %449 = vmatpush1.msra.mxu0 0.0
      %450 = vmatprep.subr.mxu0 0.0
      %451 = vmatpush1.msra.mxu0 0.0
      %452 = vmatprep.subr.mxu0 0.0
      %453 = vmatpush1.msra.mxu0 0.0
      %454 = vmatprep.subr.mxu0 0.0
      %455 = vmatpush1.msra.mxu0 0.0
      %456 = vmatprep.subr.mxu0 0.0
      %457 = vmatpush1.msra.mxu0 0.0
      %458 = vmatprep.subr.mxu0 0.0
      %459 = vmatpush1.msra.mxu0 0.0
      %460 = vmatprep.subr.mxu0 0.0
      %461 = vmatpush1.msra.mxu0 0.0
      %462 = vmatprep.subr.mxu0 0.0
      %463 = vmatpush1.msra.mxu0 0.0
      %464 = vmatprep.subr.mxu0 0.0
      %465 = vmatpush1.msra.mxu0 0.0
      %466 = vmatprep.subr.mxu0 0.0
      %467 = vmatpush1.msra.mxu0 0.0
      %468 = vmatprep.subr.mxu0 0.0
      %469 = vmatpush1.msra.mxu0 %v433
      %470 = vmatprep.subr.mxu0 0.0
      %471 = vmatpush2.msra.mxu0 0.0
      %472 = vmatprep.subr.mxu0 0.0
      %473 = vmatpush2.msra.mxu0 0.0
      %474 = vmatprep.subr.mxu0 0.0
      %475 = vmatpush2.msra.mxu0 0.0
      %476 = vmatprep.subr.mxu0 0.0
      %477 = vmatpush2.msra.mxu0 0.0
      %478 = vmatprep.subr.mxu0 0.0
      %479 = vmatpush2.msra.mxu0 0.0
      %480 = vmatprep.subr.mxu0 0.0
      %481 = vmatpush2.msra.mxu0 0.0
      %482 = vmatprep.subr.mxu0 0.0
      %483 = vmatpush2.msra.mxu0 0.0
      %484 = vmatprep.subr.mxu0 0.0
      %485 = vmatpush2.msra.mxu0 0.0
      %486 = vmatprep.subr.mxu0 0.0
      %487 = vmatpush2.msra.mxu0 0.0
      %488 = vmatprep.subr.mxu0 0.0
      %489 = vmatpush2.msra.mxu0 0.0
      %490 = vmatprep.subr.mxu0 0.0
      %491 = vmatpush2.msra.mxu0 0.0
      %492 = vmatprep.subr.mxu0 0.0
      %493 = vmatpush2.msra.mxu0 0.0
      %494 = vmatprep.subr.mxu0 0.0
      %495 = vmatpush2.msra.mxu0 0.0
      %496 = vmatprep.subr.mxu0 0.0
      %497 = vmatpush2.msra.mxu0 0.0
      %498 = vmatprep.subr.mxu0 0.0
      %499 = vmatpush2.msra.mxu0 0.0
      %500 = vmatprep.subr.mxu0 0.0
      %501 = vmatpush2.msra.mxu0 0.0
      %502 = vmatprep.mubr.f32.mxu0 0.0
      %503 = vmatmul.mubr.f32.gmra.mxu0 %v436
      %v504 = vpop.f32.mrf.mxu0
      %v505 = vadd.f32 0.0, %v504
      %v506 = vpop.f32.mrf.mxu0
      %507 = vdwg.mxu0
      %v508 = vadd.f32 %v427, %v505
      %v509 = vrcp.pop %v431
      %v510 = vmul.f32 %v508, %v509
      %511 = vrot.lane.b32.xlu0 %v168, 112
      %v512 = vpop.permute.xlu0 %511
      %513 = vrot.lane.b32.xlu0 %v168, 80
      %v514 = vpop.permute.xlu0 %513
      %v515 = vsel %vm172, %v512, 0
      %v517 = vsel %vm172, %v514, 0
      %519 = vmatprep.subr.mxu0 0.0
      %520 = vmatpush1.xpose.msra.mxu0 0.0
      %521 = vmatprep.subr.mxu0 0.0
      %522 = vmatpush1.xpose.msra.mxu0 0.0
      %523 = vmatprep.subr.mxu0 0.0
      %524 = vmatpush1.xpose.msra.mxu0 0.0
      %525 = vmatprep.subr.mxu0 0.0
      %526 = vmatpush1.xpose.msra.mxu0 0.0
      %527 = vmatprep.subr.mxu0 0.0
      %528 = vmatpush1.xpose.msra.mxu0 0.0
      %529 = vmatprep.subr.mxu0 0.0
      %530 = vmatpush1.xpose.msra.mxu0 0.0
      %531 = vmatprep.subr.mxu0 0.0
      %532 = vmatpush1.xpose.msra.mxu0 0.0
      %533 = vmatprep.subr.mxu0 0.0
      %534 = vmatpush1.xpose.msra.mxu0 0.0
      %535 = vmatprep.subr.mxu0 0.0
      %536 = vmatpush1.xpose.msra.mxu0 0.0
      %537 = vmatprep.subr.mxu0 0.0
      %538 = vmatpush1.xpose.msra.mxu0 0.0
      %539 = vmatprep.subr.mxu0 0.0
      %540 = vmatpush1.xpose.msra.mxu0 0.0
      %541 = vmatprep.subr.mxu0 0.0
      %542 = vmatpush1.xpose.msra.mxu0 0.0
      %543 = vmatprep.subr.mxu0 0.0
      %544 = vmatpush1.xpose.msra.mxu0 0.0
      %545 = vmatprep.subr.mxu0 0.0
      %546 = vmatpush1.xpose.msra.mxu0 0.0
      %547 = vmatprep.subr.mxu0 0.0
      %548 = vmatpush1.xpose.msra.mxu0 0.0
      %549 = vmatprep.subr.mxu0 0.0
      %550 = vmatpush1.xpose.msra.mxu0 %v517
      %551 = vmatprep.subr.mxu0 0.0
      %552 = vmatpush2.xpose.msra.mxu0 0.0
      %553 = vmatprep.subr.mxu0 0.0
      %554 = vmatpush2.xpose.msra.mxu0 0.0
      %555 = vmatprep.subr.mxu0 0.0
      %556 = vmatpush2.xpose.msra.mxu0 0.0
      %557 = vmatprep.subr.mxu0 0.0
      %558 = vmatpush2.xpose.msra.mxu0 0.0
      %559 = vmatprep.subr.mxu0 0.0
      %560 = vmatpush2.xpose.msra.mxu0 0.0
      %561 = vmatprep.subr.mxu0 0.0
      %562 = vmatpush2.xpose.msra.mxu0 0.0
      %563 = vmatprep.subr.mxu0 0.0
      %564 = vmatpush2.xpose.msra.mxu0 0.0
      %565 = vmatprep.subr.mxu0 0.0
      %566 = vmatpush2.xpose.msra.mxu0 0.0
      %567 = vmatprep.subr.mxu0 0.0
      %568 = vmatpush2.xpose.msra.mxu0 0.0
      %569 = vmatprep.subr.mxu0 0.0
      %570 = vmatpush2.xpose.msra.mxu0 0.0
      %571 = vmatprep.subr.mxu0 0.0
      %572 = vmatpush2.xpose.msra.mxu0 0.0
      %573 = vmatprep.subr.mxu0 0.0
      %574 = vmatpush2.xpose.msra.mxu0 0.0
      %575 = vmatprep.subr.mxu0 0.0
      %576 = vmatpush2.xpose.msra.mxu0 0.0
      %577 = vmatprep.subr.mxu0 0.0
      %578 = vmatpush2.xpose.msra.mxu0 0.0
      %579 = vmatprep.subr.mxu0 0.0
      %580 = vmatpush2.xpose.msra.mxu0 0.0
      %581 = vmatprep.subr.mxu0 0.0
      %582 = vmatpush2.xpose.msra.mxu0 0.0
      %583 = vmatprep.mubr.f32.mxu0 0.0
      %584 = vmatmul.mubr.f32.gmra.mxu0 %v515
      %v585 = vpop.f32.mrf.mxu0
      %v586 = vadd.f32 0.0, %v585
      %v587 = vpop.f32.mrf.mxu0
      %588 = vdwg.mxu0
      %v589 = vsel %vm172, %v586, -inf
      %590 = vmax.xlane.f32.xlu0 %v589
      %v591 = vpop.xlane.xlu0 %590
      %v592 = vsub.f32 -inf, %v591
      %v593 = vmul.f32 %v592, 1.442695
      %v594 = vpow.pop %v593
      %v595 = vsub.f32 %v586, %v591
      %v596 = vmul.f32 %v595, 1.442695
      %v597 = vpow.pop %v596
      %v598 = vmul.f32 %v594, 0.0
      %v599 = vsel %vm172, %v597, 0.0
      %600 = vadd.xlane.f32.xlu0 %v599
      %v601 = vpop.xlane.xlu0 %600
      %v602 = vadd.f32 %v598, %v601
      %603 = vrot.lane.b32.xlu0 %v168, 48
      %v604 = vpop.permute.xlu0 %603
      %v607 = vsel %vm172, %v597, 0
      %609 = vmatprep.subr.mxu0 0.0
      %610 = vmatpush1.msra.mxu0 0.0
      %611 = vmatprep.subr.mxu0 0.0
      %612 = vmatpush1.msra.mxu0 0.0
      %613 = vmatprep.subr.mxu0 0.0
      %614 = vmatpush1.msra.mxu0 0.0
      %615 = vmatprep.subr.mxu0 0.0
      %616 = vmatpush1.msra.mxu0 0.0
      %617 = vmatprep.subr.mxu0 0.0
      %618 = vmatpush1.msra.mxu0 0.0
      %619 = vmatprep.subr.mxu0 0.0
      %620 = vmatpush1.msra.mxu0 0.0
      %621 = vmatprep.subr.mxu0 0.0
      %622 = vmatpush1.msra.mxu0 0.0
      %623 = vmatprep.subr.mxu0 0.0
      %624 = vmatpush1.msra.mxu0 0.0
      %625 = vmatprep.subr.mxu0 0.0
      %626 = vmatpush1.msra.mxu0 0.0
      %627 = vmatprep.subr.mxu0 0.0
      %628 = vmatpush1.msra.mxu0 0.0
      %629 = vmatprep.subr.mxu0 0.0
      %630 = vmatpush1.msra.mxu0 0.0
      %631 = vmatprep.subr.mxu0 0.0
      %632 = vmatpush1.msra.mxu0 0.0
      %633 = vmatprep.subr.mxu0 0.0
      %634 = vmatpush1.msra.mxu0 0.0
      %635 = vmatprep.subr.mxu0 0.0
      %636 = vmatpush1.msra.mxu0 0.0
      %637 = vmatprep.subr.mxu0 0.0
      %638 = vmatpush1.msra.mxu0 0.0
      %639 = vmatprep.subr.mxu0 0.0
      %640 = vmatpush1.msra.mxu0 %v604
      %641 = vmatprep.subr.mxu0 0.0
      %642 = vmatpush2.msra.mxu0 0.0
      %643 = vmatprep.subr.mxu0 0.0
      %644 = vmatpush2.msra.mxu0 0.0
      %645 = vmatprep.subr.mxu0 0.0
      %646 = vmatpush2.msra.mxu0 0.0
      %647 = vmatprep.subr.mxu0 0.0
      %648 = vmatpush2.msra.mxu0 0.0
      %649 = vmatprep.subr.mxu0 0.0
      %650 = vmatpush2.msra.mxu0 0.0
      %651 = vmatprep.subr.mxu0 0.0
      %652 = vmatpush2.msra.mxu0 0.0
      %653 = vmatprep.subr.mxu0 0.0
      %654 = vmatpush2.msra.mxu0 0.0
      %655 = vmatprep.subr.mxu0 0.0
      %656 = vmatpush2.msra.mxu0 0.0
      %657 = vmatprep.subr.mxu0 0.0
      %658 = vmatpush2.msra.mxu0 0.0
      %659 = vmatprep.subr.mxu0 0.0
      %660 = vmatpush2.msra.mxu0 0.0
      %661 = vmatprep.subr.mxu0 0.0
      %662 = vmatpush2.msra.mxu0 0.0
      %663 = vmatprep.subr.mxu0 0.0
      %664 = vmatpush2.msra.mxu0 0.0
      %665 = vmatprep.subr.mxu0 0.0
      %666 = vmatpush2.msra.mxu0 0.0
      %667 = vmatprep.subr.mxu0 0.0
      %668 = vmatpush2.msra.mxu0 0.0
      %669 = vmatprep.subr.mxu0 0.0
      %670 = vmatpush2.msra.mxu0 0.0
      %671 = vmatprep.subr.mxu0 0.0
      %672 = vmatpush2.msra.mxu0 0.0
      %673 = vmatprep.mubr.f32.mxu0 0.0
      %674 = vmatmul.mubr.f32.gmra.mxu0 %v607
      %v675 = vpop.f32.mrf.mxu0
      %v676 = vadd.f32 0.0, %v675
      %v677 = vpop.f32.mrf.mxu0
      %678 = vdwg.mxu0
      %v679 = vadd.f32 %v598, %v676
      %v680 = vrcp.pop %v602
      %v681 = vmul.f32 %v679, %v680
      %682 = vrot.lane.b32.xlu0 %v168, 104
      %v683 = vpop.permute.xlu0 %682
      %684 = vrot.lane.b32.xlu0 %v168, 72
      %v685 = vpop.permute.xlu0 %684
      %v686 = vsel %vm172, %v683, 0
      %v688 = vsel %vm172, %v685, 0
      %690 = vmatprep.subr.mxu0 0.0
      %691 = vmatpush1.xpose.msra.mxu0 0.0
      %692 = vmatprep.subr.mxu0 0.0
      %693 = vmatpush1.xpose.msra.mxu0 0.0
      %694 = vmatprep.subr.mxu0 0.0
      %695 = vmatpush1.xpose.msra.mxu0 0.0
      %696 = vmatprep.subr.mxu0 0.0
      %697 = vmatpush1.xpose.msra.mxu0 0.0
      %698 = vmatprep.subr.mxu0 0.0
      %699 = vmatpush1.xpose.msra.mxu0 0.0
      %700 = vmatprep.subr.mxu0 0.0
      %701 = vmatpush1.xpose.msra.mxu0 0.0
      %702 = vmatprep.subr.mxu0 0.0
      %703 = vmatpush1.xpose.msra.mxu0 0.0
      %704 = vmatprep.subr.mxu0 0.0
      %705 = vmatpush1.xpose.msra.mxu0 0.0
      %706 = vmatprep.subr.mxu0 0.0
      %707 = vmatpush1.xpose.msra.mxu0 0.0
      %708 = vmatprep.subr.mxu0 0.0
      %709 = vmatpush1.xpose.msra.mxu0 0.0
      %710 = vmatprep.subr.mxu0 0.0
      %711 = vmatpush1.xpose.msra.mxu0 0.0
      %712 = vmatprep.subr.mxu0 0.0
      %713 = vmatpush1.xpose.msra.mxu0 0.0
      %714 = vmatprep.subr.mxu0 0.0
      %715 = vmatpush1.xpose.msra.mxu0 0.0
      %716 = vmatprep.subr.mxu0 0.0
      %717 = vmatpush1.xpose.msra.mxu0 0.0
      %718 = vmatprep.subr.mxu0 0.0
      %719 = vmatpush1.xpose.msra.mxu0 0.0
      %720 = vmatprep.subr.mxu0 0.0
      %721 = vmatpush1.xpose.msra.mxu0 %v688
      %722 = vmatprep.subr.mxu0 0.0
      %723 = vmatpush2.xpose.msra.mxu0 0.0
      %724 = vmatprep.subr.mxu0 0.0
      %725 = vmatpush2.xpose.msra.mxu0 0.0
      %726 = vmatprep.subr.mxu0 0.0
      %727 = vmatpush2.xpose.msra.mxu0 0.0
      %728 = vmatprep.subr.mxu0 0.0
      %729 = vmatpush2.xpose.msra.mxu0 0.0
      %730 = vmatprep.subr.mxu0 0.0
      %731 = vmatpush2.xpose.msra.mxu0 0.0
      %732 = vmatprep.subr.mxu0 0.0
      %733 = vmatpush2.xpose.msra.mxu0 0.0
      %734 = vmatprep.subr.mxu0 0.0
      %735 = vmatpush2.xpose.msra.mxu0 0.0
      %736 = vmatprep.subr.mxu0 0.0
      %737 = vmatpush2.xpose.msra.mxu0 0.0
      %738 = vmatprep.subr.mxu0 0.0
      %739 = vmatpush2.xpose.msra.mxu0 0.0
      %740 = vmatprep.subr.mxu0 0.0
      %741 = vmatpush2.xpose.msra.mxu0 0.0
      %742 = vmatprep.subr.mxu0 0.0
      %743 = vmatpush2.xpose.msra.mxu0 0.0
      %744 = vmatprep.subr.mxu0 0.0
      %745 = vmatpush2.xpose.msra.mxu0 0.0
      %746 = vmatprep.subr.mxu0 0.0
      %747 = vmatpush2.xpose.msra.mxu0 0.0
      %748 = vmatprep.subr.mxu0 0.0
      %749 = vmatpush2.xpose.msra.mxu0 0.0
      %750 = vmatprep.subr.mxu0 0.0
      %751 = vmatpush2.xpose.msra.mxu0 0.0
      %752 = vmatprep.subr.mxu0 0.0
      %753 = vmatpush2.xpose.msra.mxu0 0.0
      %754 = vmatprep.mubr.f32.mxu0 0.0
      %755 = vmatmul.mubr.f32.gmra.mxu0 %v686
      %v756 = vpop.f32.mrf.mxu0
      %v757 = vadd.f32 0.0, %v756
      %v758 = vpop.f32.mrf.mxu0
      %759 = vdwg.mxu0
      %v760 = vsel %vm172, %v757, -inf
      %761 = vmax.xlane.f32.xlu0 %v760
      %v762 = vpop.xlane.xlu0 %761
      %v763 = vsub.f32 -inf, %v762
      %v764 = vmul.f32 %v763, 1.442695
      %v765 = vpow.pop %v764
      %v766 = vsub.f32 %v757, %v762
      %v767 = vmul.f32 %v766, 1.442695
      %v768 = vpow.pop %v767
      %v769 = vmul.f32 %v765, 0.0
      %v770 = vsel %vm172, %v768, 0.0
      %771 = vadd.xlane.f32.xlu0 %v770
      %v772 = vpop.xlane.xlu0 %771
      %v773 = vadd.f32 %v769, %v772
      %774 = vrot.lane.b32.xlu0 %v168, 40
      %v775 = vpop.permute.xlu0 %774
      %v778 = vsel %vm172, %v768, 0
      %780 = vmatprep.subr.mxu0 0.0
      %781 = vmatpush1.msra.mxu0 0.0
      %782 = vmatprep.subr.mxu0 0.0
      %783 = vmatpush1.msra.mxu0 0.0
      %784 = vmatprep.subr.mxu0 0.0
      %785 = vmatpush1.msra.mxu0 0.0
      %786 = vmatprep.subr.mxu0 0.0
      %787 = vmatpush1.msra.mxu0 0.0
      %788 = vmatprep.subr.mxu0 0.0
      %789 = vmatpush1.msra.mxu0 0.0
      %790 = vmatprep.subr.mxu0 0.0
      %791 = vmatpush1.msra.mxu0 0.0
      %792 = vmatprep.subr.mxu0 0.0
      %793 = vmatpush1.msra.mxu0 0.0
      %794 = vmatprep.subr.mxu0 0.0
      %795 = vmatpush1.msra.mxu0 0.0
      %796 = vmatprep.subr.mxu0 0.0
      %797 = vmatpush1.msra.mxu0 0.0
      %798 = vmatprep.subr.mxu0 0.0
      %799 = vmatpush1.msra.mxu0 0.0
      %800 = vmatprep.subr.mxu0 0.0
      %801 = vmatpush1.msra.mxu0 0.0
      %802 = vmatprep.subr.mxu0 0.0
      %803 = vmatpush1.msra.mxu0 0.0
      %804 = vmatprep.subr.mxu0 0.0
      %805 = vmatpush1.msra.mxu0 0.0
      %806 = vmatprep.subr.mxu0 0.0
      %807 = vmatpush1.msra.mxu0 0.0
      %808 = vmatprep.subr.mxu0 0.0
      %809 = vmatpush1.msra.mxu0 0.0
      %810 = vmatprep.subr.mxu0 0.0
      %811 = vmatpush1.msra.mxu0 %v775
      %812 = vmatprep.subr.mxu0 0.0
      %813 = vmatpush2.msra.mxu0 0.0
      %814 = vmatprep.subr.mxu0 0.0
      %815 = vmatpush2.msra.mxu0 0.0
      %816 = vmatprep.subr.mxu0 0.0
      %817 = vmatpush2.msra.mxu0 0.0
      %818 = vmatprep.subr.mxu0 0.0
      %819 = vmatpush2.msra.mxu0 0.0
      %820 = vmatprep.subr.mxu0 0.0
      %821 = vmatpush2.msra.mxu0 0.0
      %822 = vmatprep.subr.mxu0 0.0
      %823 = vmatpush2.msra.mxu0 0.0
      %824 = vmatprep.subr.mxu0 0.0
      %825 = vmatpush2.msra.mxu0 0.0
      %826 = vmatprep.subr.mxu0 0.0
      %827 = vmatpush2.msra.mxu0 0.0
      %828 = vmatprep.subr.mxu0 0.0
      %829 = vmatpush2.msra.mxu0 0.0
      %830 = vmatprep.subr.mxu0 0.0
      %831 = vmatpush2.msra.mxu0 0.0
      %832 = vmatprep.subr.mxu0 0.0
      %833 = vmatpush2.msra.mxu0 0.0
      %834 = vmatprep.subr.mxu0 0.0
      %835 = vmatpush2.msra.mxu0 0.0
      %836 = vmatprep.subr.mxu0 0.0
      %837 = vmatpush2.msra.mxu0 0.0
      %838 = vmatprep.subr.mxu0 0.0
      %839 = vmatpush2.msra.mxu0 0.0
      %840 = vmatprep.subr.mxu0 0.0
      %841 = vmatpush2.msra.mxu0 0.0
      %842 = vmatprep.subr.mxu0 0.0
      %843 = vmatpush2.msra.mxu0 0.0
      %844 = vmatprep.mubr.f32.mxu0 0.0
      %845 = vmatmul.mubr.f32.gmra.mxu0 %v778
      %v846 = vpop.f32.mrf.mxu0
      %v847 = vadd.f32 0.0, %v846
      %v848 = vpop.f32.mrf.mxu0
      %849 = vdwg.mxu0
      %v850 = vadd.f32 %v769, %v847
      %v851 = vrcp.pop %v773
      %v852 = vmul.f32 %v850, %v851
      %854 = vrot.lane.b32.xlu0 %v510, 8
      %v855 = vpop.permute.xlu0 %854
      %858 = vrot.lane.b32.xlu0 %v681, 16
      %v859 = vpop.permute.xlu0 %858
      %862 = vrot.lane.b32.xlu0 %v852, 24
      %v863 = vpop.permute.xlu0 %862
      %v865 = vsel %vm172, %v339, %v855
      %vm866 = vcmask 130048
      %v867 = vsel %vm866, %v865, %v859
      %vm868 = vcmask 195584
      %v869 = vsel %vm868, %v867, %v863
      %s870 = scalar_lea.vmem [#allocation3], %s166
      %871 = vst.msk [vmem:[%s870] sm:$0xff] %vm75, %v869
    $region38: #{tpu_custom_call.1} parent=1 // loop_footer
      %s165 = sadd.s32 1, %s161
    $region39: #{tpu_custom_call.1} parent=1 // loop_footer_branch
      %160 = sbr.rel target = $region35
    $region40: #{tpu_custom_call.1} parent=1 // loop_exit
      _
    %v872 = vld [vmem:[#allocation3] sm:$0xff]
    %v873 = vld [vmem:[#allocation3 + $0x8] sm:$0xff]
    %v874 = vld [vmem:[#allocation9] sm:$0xff]
    %v875 = vld [vmem:[#allocation9 + $0x8] sm:$0xff]
    %v876 = vld [vmem:[#allocation9 + $0x10] sm:$0xff]
    %v877 = vld [vmem:[#allocation9 + $0x18] sm:$0xff]
    %v878 = vld [vmem:[%s4] sm:$0x1]
    %v880 = vlaneseq
    %v881 = vshrl.u32 %v880, 7
    %v882 = vsub.s32 0, %v881
    %v883 = vrot.slane %v878, %v882
    %v886 = vsel %vm75, %v872, 0
    %v889 = vsel %vm75, %v873, 0
    %891 = vmatprep.subr.mxu0 0.0
    %892 = vmatpush1.msra.mxu0 0.0
    %893 = vmatprep.subr.mxu0 0.0
    %894 = vmatpush1.msra.mxu0 0.0
    %895 = vmatprep.subr.mxu0 0.0
    %896 = vmatpush1.msra.mxu0 0.0
    %897 = vmatprep.subr.mxu0 0.0
    %898 = vmatpush1.msra.mxu0 0.0
    %899 = vmatprep.subr.mxu0 0.0
    %900 = vmatpush1.msra.mxu0 0.0
    %901 = vmatprep.subr.mxu0 0.0
    %902 = vmatpush1.msra.mxu0 0.0
    %903 = vmatprep.subr.mxu0 0.0
    %904 = vmatpush1.msra.mxu0 0.0
    %905 = vmatprep.subr.mxu0 0.0
    %906 = vmatpush1.msra.mxu0 0.0
    %907 = vmatprep.subr.mxu0 0.0
    %908 = vmatpush1.msra.mxu0 0.0
    %909 = vmatprep.subr.mxu0 0.0
    %910 = vmatpush1.msra.mxu0 0.0
    %911 = vmatprep.subr.mxu0 0.0
    %912 = vmatpush1.msra.mxu0 0.0
    %913 = vmatprep.subr.mxu0 0.0
    %914 = vmatpush1.msra.mxu0 0.0
    %915 = vmatprep.subr.mxu0 0.0
    %916 = vmatpush1.msra.mxu0 %v877
    %917 = vmatprep.subr.mxu0 0.0
    %918 = vmatpush1.msra.mxu0 %v876
    %919 = vmatprep.subr.mxu0 0.0
    %920 = vmatpush1.msra.mxu0 %v875
    %921 = vmatprep.subr.mxu0 0.0
    %922 = vmatpush1.msra.mxu0 %v874
    %923 = vmatprep.subr.mxu0 0.0
    %924 = vmatpush2.msra.mxu0 0.0
    %925 = vmatprep.subr.mxu0 0.0
    %926 = vmatpush2.msra.mxu0 0.0
    %927 = vmatprep.subr.mxu0 0.0
    %928 = vmatpush2.msra.mxu0 0.0
    %929 = vmatprep.subr.mxu0 0.0
    %930 = vmatpush2.msra.mxu0 0.0
    %931 = vmatprep.subr.mxu0 0.0
    %932 = vmatpush2.msra.mxu0 0.0
    %933 = vmatprep.subr.mxu0 0.0
    %934 = vmatpush2.msra.mxu0 0.0
    %935 = vmatprep.subr.mxu0 0.0
    %936 = vmatpush2.msra.mxu0 0.0
    %937 = vmatprep.subr.mxu0 0.0
    %938 = vmatpush2.msra.mxu0 0.0
    %939 = vmatprep.subr.mxu0 0.0
    %940 = vmatpush2.msra.mxu0 0.0
    %941 = vmatprep.subr.mxu0 0.0
    %942 = vmatpush2.msra.mxu0 0.0
    %943 = vmatprep.subr.mxu0 0.0
    %944 = vmatpush2.msra.mxu0 0.0
    %945 = vmatprep.subr.mxu0 0.0
    %946 = vmatpush2.msra.mxu0 0.0
    %947 = vmatprep.subr.mxu0 0.0
    %948 = vmatpush2.msra.mxu0 0.0
    %949 = vmatprep.subr.mxu0 0.0
    %950 = vmatpush2.msra.mxu0 0.0
    %951 = vmatprep.subr.mxu0 0.0
    %952 = vmatpush2.msra.mxu0 0.0
    %953 = vmatprep.subr.mxu0 0.0
    %954 = vmatpush2.msra.mxu0 0.0
    %955 = vmatprep.mubr.f32.mxu0 0.0
    %956 = vmatmul.mubr.f32.gmra.mxu0 %v886
    %v957 = vpop.f32.mrf.mxu0
    %v958 = vadd.f32 %v883, %v957
    %v959 = vpop.f32.mrf.mxu0
    %960 = vmatprep.mubr.f32.mxu0 0.0
    %961 = vmatmul.mubr.f32.gmra.mxu0 %v889
    %v962 = vpop.f32.mrf.mxu0
    %v963 = vadd.f32 %v883, %v962
    %v964 = vpop.f32.mrf.mxu0
    %965 = vdwg.mxu0
    %966 = vst.msk [vmem:[#allocation10] sm:$0xff] %vm75, %v958
    %967 = vst.msk [vmem:[#allocation10 + $0x8] sm:$0xff] %vm75, %v963
    // Predicated region
    $region41: #{tpu_custom_call.1} parent=1 // pred_check
      _
    $region42: #{tpu_custom_call.1} parent=1 // pred_check_branch
      %969 = sbr.rel (0) target = $region44
    $region43: #{tpu_custom_call.1} parent=1 // pred_region
      %s971 = ssub.s32 256, 256
      %972 = vsyncadd [#allocation6], %s971
      %s973 = sshll.u32 [#allocation10], 4
      %s974 = int_to_ptr.vmem [resolvable:$true] %s973
      %979 = dma.vmem_to_hbm [thread:$0]  %s974, 256, %s5, [#allocation6], 128, 128, 8
    $region44: #{tpu_custom_call.1} parent=1 // pred_fallthru
      _
    // Predicated region
    $region45: #{tpu_custom_call.1} parent=1 // pred_check
      _
    $region46: #{tpu_custom_call.1} parent=1 // pred_check_branch
      %981 = sbr.rel (0) target = $region48
    $region47: #{tpu_custom_call.1} parent=1 // pred_region
      %982 = dma.done [#allocation6], 256
    $region48: #{tpu_custom_call.1} parent=1 // pred_fallthru
      _
    %983 = vsyncpa [#allocation5], 1
    %984 = vsyncpa [#allocation8], 1
    %985 = vsyncpa [#allocation6], 1

</llo_original>
